<compile_context>
chip_gen: v5e
topology: v5e:2x2
jax: 0.10.0
libtpu: 0.0.40
codegen_flags: <defaults>
</compile_context>

<pallas_src>
import functools

import jax
import jax.numpy as jnp
from jax.experimental import pallas as pl
from jax.experimental.pallas import tpu as pltpu


def _ste_kernel(x_ref, o_ref, *, thresh, out_dtype):
    # x_ref / o_ref: VMEM tiles (tm, L).  Pure VPU elementwise compare + cast.
    o_ref[...] = (x_ref[...] > thresh).astype(out_dtype)


def _round_up(v, m):
    return ((v + m - 1) // m) * m


def straight_through_estimator(
    x,
    thresh,
    *,
    lane_width=1024,
    tile_bytes=2 << 20,          # ~2 MiB per tile (input side)
    min_pallas_bytes=256 * 1024, # below this, let XLA fuse plain JAX
    out_dtype=jnp.float32,
):
    """Forward of STEFunction: (x > thresh).astype(out_dtype).

    x: any-rank float array (e.g. NCHW).
    thresh: compile-time Python float (as stored on the nn.Module).
    """
    thresh = float(thresh)
    orig_shape = x.shape
    total = 1
    for d in orig_shape:
        total *= d

    in_itemsize = jnp.dtype(x.dtype).itemsize
    out_itemsize = jnp.dtype(out_dtype).itemsize

    # Small tensors: skip the opaque custom call so XLA can fuse this 2-op
    # elementwise expression with its producers/consumers.
    if total == 0 or total * in_itemsize < min_pallas_bytes:
        return (x > thresh).astype(out_dtype)

    # Pick a lane-dense width L (multiple of 128) that divides the total size.
    L = None
    for cand in (lane_width, 512, 256, 128):
        if cand % 128 == 0 and total % cand == 0:
            L = cand
            break

    flat = x.reshape(-1)
    padded_total = total
    if L is None:
        # Fallback: pad the flat array to a multiple of lane_width so the
        # kernel keeps wide unmasked stores (never drop to L=128).
        # TODO(synk): jnp.pad is a full extra HBM read+write of the tensor;
        # if this path matters in production, handle only the <lane_width
        # tail outside the kernel instead.
        L = lane_width
        padded_total = _round_up(total, L)
        flat = jnp.pad(flat, (0, padded_total - total))

    rows = padded_total // L
    x2d = flat.reshape(rows, L)

    # Keep tile bytes ~constant regardless of L (use the larger of in/out
    # element sizes so the resident footprint estimate is conservative).
    itemsize = max(in_itemsize, out_itemsize)
    row_tile = max(8, (tile_bytes // (L * itemsize)) // 8 * 8)

    if rows <= row_tile:
        # Single block: full row extent (satisfies the (8,128) rule because
        # the block equals the full array dims).
        tm = rows
        n_blocks = 1
    else:
        # Balanced, EVEN number of blocks so the parallel grid axis splits
        # cleanly across the two TensorCores on v7x (no straggler tile).
        n_blocks = -(-rows // row_tile)          # cdiv
        if n_blocks % 2:
            n_blocks += 1
        tm = _round_up(-(-rows // n_blocks), 8)  # balanced tile, multiple of 8
        n_blocks = -(-rows // tm)

    cost = pl.CostEstimate(
        flops=padded_total,
        transcendentals=0,
        bytes_accessed=padded_total * (in_itemsize + out_itemsize),
    )

    out = pl.pallas_call(
        functools.partial(_ste_kernel, thresh=thresh, out_dtype=out_dtype),
        out_shape=jax.ShapeDtypeStruct((rows, L), out_dtype),
        grid_spec=pltpu.PrefetchScalarGridSpec(
            num_scalar_prefetch=0,
            grid=(n_blocks,),
            in_specs=[
                pl.BlockSpec((tm, L), lambda i: (i, 0)),
            ],
            out_specs=pl.BlockSpec((tm, L), lambda i: (i, 0)),
        ),
        compiler_params=pltpu.CompilerParams(
            dimension_semantics=("parallel",)),
        cost_estimate=cost,
    )(x2d)

    out_flat = out.reshape(-1)
    if padded_total != total:
        out_flat = out_flat[:total]
    return out_flat.reshape(orig_shape)


if __name__ == "__main__":
    key = jax.random.PRNGKey(0)
    thresh = 0.0

    # Small NCHW input consistent with typical use of this module.
    x_small = jax.random.normal(key, (2, 4, 16, 16), dtype=jnp.float32)

    # 1) Default path: small tensor falls through to the fused plain-JAX
    #    expression (perf-review item: skip Pallas for tiny tensors).
    y_fused = jax.block_until_ready(straight_through_estimator(x_small, thresh))

    # 2) Force the Pallas kernel on the same small input to exercise it.
    y_pallas = jax.block_until_ready(
        straight_through_estimator(x_small, thresh, min_pallas_bytes=0))

    # 3) A slightly larger input (still small) that takes the Pallas path by
    #    default and exercises the lane-dense tiling.
    key2 = jax.random.PRNGKey(0)
    x_med = jax.random.normal(key2, (8, 16, 32, 32), dtype=jnp.float32)
    y_med = jax.block_until_ready(straight_through_estimator(x_med, thresh))

    # Reference checks in plain JAX.
    ref_small = (x_small > thresh).astype(jnp.float32)
    ref_med = (x_med > thresh).astype(jnp.float32)

    for y, ref, x in ((y_fused, ref_small, x_small),
                      (y_pallas, ref_small, x_small),
                      (y_med, ref_med, x_med)):
        assert y.shape == x.shape
        assert y.dtype == jnp.float32
        assert bool(jnp.all(y == ref))

    print("KERNEL_OK")
</pallas_src>

<mosaic_0001>
module attributes {stable_mosaic.version = 11 : i64} {
  func.func @_ste_kernel(%arg0: i32, %arg1: memref<2x1024xf32, #tpu.memory_space<vmem>>, %arg2: memref<2x1024xf32, #tpu.memory_space<vmem>>) attributes {dimension_semantics = [#tpu.dimension_semantics<parallel>], iteration_bounds = array<i64: 1>, scalar_prefetch = 0 : i64, scratch_operands = 0 : i64, tpu.core_type = #tpu.core_type<tc>, window_params = [{transform_indices = @transform_0, window_bounds = array<i64: 2, 1024>}, {transform_indices = @transform_1, window_bounds = array<i64: 2, 1024>}]} {
    %c0 = arith.constant 0 : index
    %c0_0 = arith.constant 0 : index
    %0 = vector.load %arg1[%c0, %c0_0] : memref<2x1024xf32, #tpu.memory_space<vmem>>, vector<2x1024xf32>
    %cst = arith.constant 0.000000e+00 : f32
    %1 = vector.broadcast %cst : f32 to vector<2x1024xf32>
    %2 = arith.cmpf ogt, %0, %1 : vector<2x1024xf32>
    %3 = arith.extui %2 : vector<2x1024xi1> to vector<2x1024xi32>
    %4 = arith.sitofp %3 : vector<2x1024xi32> to vector<2x1024xf32>
    %c0_1 = arith.constant 0 : index
    %c0_2 = arith.constant 0 : index
    %5 = vector.load %arg2[%c0_1, %c0_2] : memref<2x1024xf32, #tpu.memory_space<vmem>>, vector<2x1024xf32>
    tpu.vector_store %arg2[%c0_1, %c0_2], %4 {strides = array<i32>} : memref<2x1024xf32, #tpu.memory_space<vmem>>, vector<2x1024xf32>,
    return
  }
  func.func @transform_0(%arg0: i32) -> (i32, i32) {
    %c0_i32 = arith.constant 0 : i32
    %c0_i32_0 = arith.constant 0 : i32
    return %arg0, %c0_i32 : i32, i32
  }
  func.func @transform_1(%arg0: i32) -> (i32, i32) {
    %c0_i32 = arith.constant 0 : i32
    %c0_i32_0 = arith.constant 0 : i32
    return %arg0, %c0_i32 : i32, i32
  }
}

</mosaic_0001>

<llo_original>
// kernel: tpu_custom_call.1
$region0: #{tpu_custom_call.1}
  #allocation0 [shape = 'u32[]', space=smem, size = 0x4, offset = 0x4, fixed_abs, tag = 'smem constant byte address 0x4 - core index']
  #allocation1 [shape = 'u32[72,128]{1,0:T(1,128)}', space=vmem, size = 0x9000, scoped, tag = 'internal scratch']
  %s0 = inlined_call_operand.hbm [shape: f32[2,1024], index: 0, kind: input, shape index: {}]
  %s1 = inlined_call_operand.hbm [shape: f32[2,1024], index: 1, kind: output, shape index: {}]
  %s2 = sld [smem:[#allocation0]]
  $region18: #{tpu_custom_call.1} parent=0
    _
  %s4 = ssub.s32 1, %s2
  %s5 = scalar_select 0, %s4, %s2
  $region1: #{tpu_custom_call.1} parent=0
    #allocation2 [shape = 'u8[8192]{0}', space=vmem, size = 0x2000, scoped, tag = 'input window, operand 0, single buffered']
    #allocation3 [shape = 's32[1]{0}', space=sflag, size = 0x4, scoped, tag = 'scoped memory for tpu_custom_call.1']
    #allocation4 [shape = 's32[1]{0}', space=sflag, size = 0x4, scoped, tag = 'scoped memory for tpu_custom_call.1']
    #allocation5 [shape = 'u8[8192]{0}', space=vmem, size = 0x2000, scoped, tag = 'output window, operand 0, single buffered']
    %6 = vsyncpa [#allocation3], 0
    %7 = vsyncpa [#allocation4], 0
    // Predicated region
    $region2: #{tpu_custom_call.1} parent=1 // pred_check
      _
    $region3: #{tpu_custom_call.1} parent=1 // pred_check_branch
      %9 = sbr.rel (0) target = $region5
    $region4: #{tpu_custom_call.1} parent=1 // pred_region
      %11 = vsyncadd [#allocation3], 0
      %s13 = sshll.u32 %s0, 4
      %s14 = int_to_ptr.hbm [resolvable:$true] %s13
      %s15 = sshll.u32 [#allocation2], 4
      %s16 = int_to_ptr.vmem [resolvable:$true] %s15
      %18 = dma.hbm_to_vmem [thread:$0]  %s14, 256, %s16, [#allocation3]
    $region5: #{tpu_custom_call.1} parent=1 // pred_fallthru
      _
    // Predicated region
    $region6: #{tpu_custom_call.1} parent=1 // pred_check
      _
    $region7: #{tpu_custom_call.1} parent=1 // pred_check_branch
      %20 = sbr.rel (0) target = $region9
    $region8: #{tpu_custom_call.1} parent=1 // pred_region
      %22 = dma.done [#allocation3], 256
    $region9: #{tpu_custom_call.1} parent=1 // pred_fallthru
      _
    %v23 = vld [vmem:[#allocation2] sm:$0xff]
    %v24 = vld [vmem:[#allocation2 + $0x8] sm:$0xff]
    %vm25 = vcmp.gt.f32.partialorder %v23, 0.0
    %vm26 = vcmp.gt.f32.partialorder %v24, 0.0
    %v27 = vsel %vm25, 1, 0
    %v28 = vsel %vm26, 1, 0
    %v29 = vcvt.s32.f32 %v27
    %v30 = vcvt.s32.f32 %v28
    %31 = vst [vmem:[#allocation5] sm:$0xff] %v29
    %32 = vst [vmem:[#allocation5 + $0x8] sm:$0xff] %v30
    // Predicated region
    $region10: #{tpu_custom_call.1} parent=1 // pred_check
      _
    $region11: #{tpu_custom_call.1} parent=1 // pred_check_branch
      %34 = sbr.rel (0) target = $region13
    $region12: #{tpu_custom_call.1} parent=1 // pred_region
      %36 = vsyncadd [#allocation4], 0
      %s38 = sshll.u32 [#allocation5], 4
      %s39 = int_to_ptr.vmem [resolvable:$true] %s38
      %s40 = sshll.u32 %s1, 4
      %s41 = int_to_ptr.hbm [resolvable:$true] %s40
      %43 = dma.vmem_to_hbm [thread:$0]  %s39, 256, %s41, [#allocation4]
    $region13: #{tpu_custom_call.1} parent=1 // pred_fallthru
      _
    // Predicated region
    $region14: #{tpu_custom_call.1} parent=1 // pred_check
      _
    $region15: #{tpu_custom_call.1} parent=1 // pred_check_branch
      %45 = sbr.rel (0) target = $region17
    $region16: #{tpu_custom_call.1} parent=1 // pred_region
      %47 = dma.done [#allocation4], 256
    $region17: #{tpu_custom_call.1} parent=1 // pred_fallthru
      _
    %48 = vsyncpa [#allocation3], 1
    %49 = vsyncpa [#allocation4], 1

</llo_original>
